<compile_context>
chip_gen: v7x
topology: tpu7x:2x2x1
jax: 0.10.0
libtpu: 0.0.40
codegen_flags: <defaults>
</compile_context>

<pallas_src>
import functools
import math

import jax
import jax.numpy as jnp
from jax import lax
from jax.experimental import pallas as pl
from jax.experimental.pallas import tpu as pltpu

EPS = 1e-6
# MXU operand dtype: bf16 is native on v5e/v6e/v7x (~3-4x f32-emulated matmul
# throughput).  Accumulation is always f32 (preferred_element_type).
MXU_DTYPE = jnp.bfloat16


# ------------------------- hardware-adaptive knobs -------------------------- #

def _tpu_defaults():
    """Pick scoped-VMEM limit and max row tile from the part's VMEM capacity."""
    vmem_limit = 32 * 1024 * 1024   # safe everywhere (incl. v7x 64 MiB)
    row_tile = 256
    try:
        info = pltpu.get_tpu_info()
        cap = getattr(info, "vmem_capacity_bytes", None)
        if cap is not None and cap >= 100 * 1024 * 1024:   # v5e / v6e: 128 MiB
            vmem_limit = 64 * 1024 * 1024
            row_tile = 512
    except Exception:
        pass
    return vmem_limit, row_tile


VMEM_LIMIT, MAX_ROW_TILE = _tpu_defaults()


def _detect_single_buffer():
    """Feature-detect pipeline_mode=pl.Buffered(1) on constant-index operands
    (single-buffered weights: halves weight VMEM).  Probe mirrors real usage
    (2-D grid, parallel+arbitrary, constant index_map); falls back to the
    default double-buffering if unsupported."""
    try:
        mode = pl.Buffered(1)

        def _k(w_ref, x_ref, o_ref):
            o_ref[...] = x_ref[...] + w_ref[...]

        y = pl.pallas_call(
            _k,
            grid=(2, 1),
            in_specs=[pl.BlockSpec((8, 128), lambda i, j: (0, 0),
                                   pipeline_mode=mode),
                      pl.BlockSpec((8, 128), lambda i, j: (i, 0))],
            out_specs=pl.BlockSpec((8, 128), lambda i, j: (i, 0)),
            out_shape=jax.ShapeDtypeStruct((16, 128), jnp.float32),
            compiler_params=pltpu.CompilerParams(
                dimension_semantics=("parallel", "arbitrary"),
                vmem_limit_bytes=VMEM_LIMIT),
        )(jnp.ones((8, 128), jnp.float32), jnp.ones((16, 128), jnp.float32))
        jax.block_until_ready(y)
        return mode
    except Exception:
        return None


_WEIGHT_PIPELINE_MODE = _detect_single_buffer()


# ------------------------------ helpers ------------------------------------ #

def _row_tile(m):
    # Largest row tile <= MAX_ROW_TILE (or the full extent when small).
    # If m is not a multiple of the tile, the trailing block is padded; every
    # kernel here is row-wise independent, so pad rows compute garbage that is
    # clipped on writeback (do NOT add cross-row reductions without fixing this).
    return m if m <= MAX_ROW_TILE else MAX_ROW_TILE


def _col_tile(n, candidates=(1024, 512, 256, 128)):
    # Largest tile that evenly divides n (avoids padded partial blocks feeding
    # reduction accumulators); otherwise the full extent.
    for t in candidates:
        if n % t == 0:
            return t
    return n


def _dot(a, b):
    return jnp.dot(a.astype(MXU_DTYPE), b.astype(MXU_DTYPE),
                   preferred_element_type=jnp.float32)


def _layernorm(x, a, b):
    # Annotated-Transformer LayerNorm: a*(x-mean)/(std+eps)+b, torch.std ddof=1.
    d = x.shape[-1]
    mean = jnp.mean(x, axis=-1, keepdims=True)
    xc = x - mean
    var = jnp.sum(xc * xc, axis=-1, keepdims=True) / jnp.float32(d - 1)
    inv = pl.reciprocal(jnp.sqrt(var) + EPS, approx=True)
    return a * xc * inv + b


def _row_spec(tm, ncols):
    return pl.BlockSpec((tm, ncols), lambda *idx: (idx[0], 0))


def _const_spec(shape):
    # Constant-index (grid-invariant) operand: weights / biases / LN params.
    zeros = (0,) * len(shape)
    index_map = lambda *_: zeros
    if _WEIGHT_PIPELINE_MODE is not None:
        return pl.BlockSpec(shape, index_map,
                            pipeline_mode=_WEIGHT_PIPELINE_MODE)
    return pl.BlockSpec(shape, index_map)


def _cparams(semantics):
    return pltpu.CompilerParams(dimension_semantics=semantics,
                                vmem_limit_bytes=VMEM_LIMIT)


# ------------------------------ kernels ------------------------------------ #

def _embed_kernel(x_ref, w_ref, b_ref, o_ref):
    o_ref[...] = _dot(x_ref[...], w_ref[...]) + b_ref[...]


def _ln_qkv_kernel(x_ref, a_ref, b_ref, w_ref, bias_ref, o_ref):
    # Fused: LayerNorm -> concatenated [Wq|Wk|Wv] matmul.
    xn = _layernorm(x_ref[...], a_ref[...], b_ref[...])
    o_ref[...] = _dot(xn, w_ref[...]) + bias_ref[...]


def _attn_kernel(qkv_ref, res_ref, wo_ref, bo_ref, o_ref, *, h, dk, d_model):
    # Fused per-batch multi-head attention + output projection + residual.
    # qkv block: (1, S, 3*d_model); heads are static column slices, and the
    # O-projection is folded into the head reduction:
    #   out = res + b_o + sum_h softmax(q_h k_h^T) v_h @ Wo[h*dk:(h+1)*dk, :]
    # so the only store is one dense (S, d_model) slab (lane-aligned), and the
    # per-head (S,S) score / prob tiles die every iteration.
    scale = 1.0 / math.sqrt(dk)
    slab = qkv_ref[0]                       # (S, 3*d_model) f32
    acc = res_ref[0] + bo_ref[...]          # (S, d_model)  f32
    for hh in range(h):                     # h is small; reduction over heads
        q = slab[:, hh * dk:(hh + 1) * dk] * scale
        k = slab[:, d_model + hh * dk:d_model + (hh + 1) * dk]
        v = slab[:, 2 * d_model + hh * dk:2 * d_model + (hh + 1) * dk]
        s = lax.dot_general(q.astype(MXU_DTYPE), k.astype(MXU_DTYPE),
                            (((1,), (1,)), ((), ())),
                            preferred_element_type=jnp.float32)
        m = jnp.max(s, axis=-1, keepdims=True)
        p = jnp.exp(s - m)
        p = p * pl.reciprocal(jnp.sum(p, axis=-1, keepdims=True), approx=True)
        ohead = _dot(p, v)                                   # (S, dk)
        acc = acc + _dot(ohead, wo_ref[hh * dk:(hh + 1) * dk, :])
    o_ref[0] = acc


def _ffn_res_kernel(x_ref, a_ref, b_ref, w1_ref, b1_ref, w2_ref, b2_ref, o_ref):
    # Fused: LayerNorm -> FF1 -> ReLU -> FF2 -> residual, tiled over d_ff.
    # Grid: (row blocks, d_ff blocks); d_ff axis is a reduction ("arbitrary"),
    # partial FF2 products accumulate in the resident f32 output block.
    k = pl.program_id(1)
    x = x_ref[...]
    xn = _layernorm(x, a_ref[...], b_ref[...])       # cheap; recomputed per k
    hmid = jnp.maximum(_dot(xn, w1_ref[...]) + b1_ref[...], 0.0)
    part = _dot(hmid, w2_ref[...])

    @pl.when(k == 0)
    def _():
        o_ref[...] = x + b2_ref[...] + part

    @pl.when(k > 0)
    def _():
        o_ref[...] = o_ref[...] + part


def _head_logits_kernel(x_ref, a_ref, b_ref, w_ref, bias_ref,
                        logits_ref, lse_ref, m_sc, l_sc):
    # Pass 1 of the head: LayerNorm -> final linear per vocab tile, plus an
    # online running-max / running-sum-exp (LSE) per row in VMEM scratch.
    j = pl.program_id(1)
    xn = _layernorm(x_ref[...], a_ref[...], b_ref[...])
    logits = _dot(xn, w_ref[...]) + bias_ref[...]
    logits_ref[...] = logits

    @pl.when(j == 0)
    def _():
        m_sc[...] = jnp.full(m_sc.shape, -jnp.inf, dtype=m_sc.dtype)
        l_sc[...] = jnp.zeros(l_sc.shape, dtype=l_sc.dtype)

    m_prev = m_sc[...]
    m_new = jnp.maximum(m_prev, jnp.max(logits, axis=-1, keepdims=True))
    l_sc[...] = (l_sc[...] * jnp.exp(m_prev - m_new)
                 + jnp.sum(jnp.exp(logits - m_new), axis=-1, keepdims=True))
    m_sc[...] = m_new
    lse_ref[...] = m_new + jnp.log(l_sc[...])   # final value correct at last j


def _logsoftmax_kernel(logits_ref, lse_ref, o_ref):
    # Pass 2 of the head: out = logits - lse (exact log_softmax finalize).
    o_ref[...] = logits_ref[...] - lse_ref[...]


# ------------------------------ pallas_call wrappers ------------------------ #

def embed(x, w, b):
    m, kin = x.shape
    n = w.shape[1]
    tm = _row_tile(m)
    return pl.pallas_call(
        _embed_kernel,
        grid=(pl.cdiv(m, tm),),
        in_specs=[_row_spec(tm, kin), _const_spec(w.shape), _const_spec(b.shape)],
        out_specs=_row_spec(tm, n),
        out_shape=jax.ShapeDtypeStruct((m, n), jnp.float32),
        compiler_params=_cparams(("parallel",)),
        cost_estimate=pl.CostEstimate(
            flops=int(2 * m * kin * n), transcendentals=0,
            bytes_accessed=int(4 * m * kin + 2 * kin * n + 4 * m * n)),
    )(x, w, b)


def ln_qkv(x, ln_a, ln_b, w_qkv, b_qkv):
    m, d = x.shape
    n = w_qkv.shape[1]
    tm = _row_tile(m)
    return pl.pallas_call(
        _ln_qkv_kernel,
        grid=(pl.cdiv(m, tm),),
        in_specs=[_row_spec(tm, d),
                  _const_spec(ln_a.shape), _const_spec(ln_b.shape),
                  _const_spec(w_qkv.shape), _const_spec(b_qkv.shape)],
        out_specs=_row_spec(tm, n),
        out_shape=jax.ShapeDtypeStruct((m, n), jnp.float32),
        compiler_params=_cparams(("parallel",)),
        cost_estimate=pl.CostEstimate(
            flops=int(2 * m * d * n + 8 * m * d), transcendentals=int(m),
            bytes_accessed=int(4 * m * d + 2 * d * n + 4 * m * n)),
    )(x, ln_a, ln_b, w_qkv, b_qkv)


def attention_block(qkv_bsd, res_bsd, w_o, b_o, h, d_model):
    B, S, n3 = qkv_bsd.shape
    dk = d_model // h
    kern = functools.partial(_attn_kernel, h=h, dk=dk, d_model=d_model)
    return pl.pallas_call(
        kern,
        grid=(B,),
        in_specs=[pl.BlockSpec((1, S, n3), lambda b: (b, 0, 0)),
                  pl.BlockSpec((1, S, d_model), lambda b: (b, 0, 0)),
                  _const_spec(w_o.shape), _const_spec(b_o.shape)],
        out_specs=pl.BlockSpec((1, S, d_model), lambda b: (b, 0, 0)),
        out_shape=jax.ShapeDtypeStruct((B, S, d_model), jnp.float32),
        compiler_params=_cparams(("parallel",)),
        cost_estimate=pl.CostEstimate(
            flops=int(B * (4 * S * S * d_model + 2 * S * d_model * d_model)),
            transcendentals=int(B * h * S * S),
            bytes_accessed=int(4 * B * S * (n3 + 2 * d_model)
                               + 2 * d_model * d_model)),
    )(qkv_bsd, res_bsd, w_o, b_o)


def ffn_residual(x, ln_a, ln_b, w1, b1, w2, b2):
    m, d = x.shape
    dff = w1.shape[1]
    tm = _row_tile(m)
    tff = _col_tile(dff, (512, 256, 128))
    grid = (pl.cdiv(m, tm), dff // tff)
    return pl.pallas_call(
        _ffn_res_kernel,
        grid=grid,
        in_specs=[pl.BlockSpec((tm, d), lambda i, k: (i, 0)),
                  _const_spec(ln_a.shape), _const_spec(ln_b.shape),
                  pl.BlockSpec((d, tff), lambda i, k: (0, k)),
                  pl.BlockSpec((1, tff), lambda i, k: (0, k)),
                  pl.BlockSpec((tff, d), lambda i, k: (k, 0)),
                  _const_spec(b2.shape)],
        out_specs=pl.BlockSpec((tm, d), lambda i, k: (i, 0)),
        out_shape=jax.ShapeDtypeStruct((m, d), jnp.float32),
        compiler_params=_cparams(("parallel", "arbitrary")),
        cost_estimate=pl.CostEstimate(
            flops=int(4 * m * d * dff), transcendentals=int(m),
            bytes_accessed=int(8 * m * d + 4 * d * dff)),
    )(x, ln_a, ln_b, w1, b1, w2, b2)


def final_head(x, ln_a, ln_b, w, b):
    m, d = x.shape
    vocab = w.shape[1]
    tm = _row_tile(m)
    tv = _col_tile(vocab, (1024, 512, 256, 128))
    grid = (pl.cdiv(m, tm), vocab // tv)

    # Pass 1: vocab-tiled logits + online LSE.
    logits, lse = pl.pallas_call(
        _head_logits_kernel,
        grid=grid,
        in_specs=[pl.BlockSpec((tm, d), lambda i, j: (i, 0)),
                  _const_spec(ln_a.shape), _const_spec(ln_b.shape),
                  pl.BlockSpec((d, tv), lambda i, j: (0, j)),
                  pl.BlockSpec((1, tv), lambda i, j: (0, j))],
        out_specs=[pl.BlockSpec((tm, tv), lambda i, j: (i, j)),
                   pl.BlockSpec((tm, 1), lambda i, j: (i, 0))],
        out_shape=(jax.ShapeDtypeStruct((m, vocab), jnp.float32),
                   jax.ShapeDtypeStruct((m, 1), jnp.float32)),
        scratch_shapes=[pltpu.VMEM((tm, 1), jnp.float32),
                        pltpu.VMEM((tm, 1), jnp.float32)],
        compiler_params=_cparams(("parallel", "arbitrary")),
        cost_estimate=pl.CostEstimate(
            flops=int(2 * m * d * vocab), transcendentals=int(m * vocab),
            bytes_accessed=int(4 * m * d + 2 * d * vocab + 4 * m * vocab)),
    )(x, ln_a, ln_b, w, b)

    # Pass 2: log_softmax finalize (memory-bound, lane-dense tiles).
    return pl.pallas_call(
        _logsoftmax_kernel,
        grid=grid,
        in_specs=[pl.BlockSpec((tm, tv), lambda i, j: (i, j)),
                  pl.BlockSpec((tm, 1), lambda i, j: (i, 0))],
        out_specs=pl.BlockSpec((tm, tv), lambda i, j: (i, j)),
        out_shape=jax.ShapeDtypeStruct((m, vocab), jnp.float32),
        compiler_params=_cparams(("parallel", "parallel")),
        cost_estimate=pl.CostEstimate(
            flops=int(m * vocab), transcendentals=0,
            bytes_accessed=int(8 * m * vocab)),
    )(logits, lse)


# ------------------------------ parameters --------------------------------- #

def init_params(key, d_in, d_model, h, d_ff, n_layers, vocab):
    keys = iter(jax.random.split(key, 8 * n_layers + 8))

    def lin(fan_in, fan_out):
        w = jax.random.normal(next(keys), (fan_in, fan_out), jnp.float32)
        w = (w / jnp.sqrt(jnp.float32(fan_in))).astype(MXU_DTYPE)  # bf16 weights
        b = jnp.zeros((1, fan_out), jnp.float32)
        return {"w": w, "b": b}

    def ln():
        return (jnp.ones((1, d_model), jnp.float32),
                jnp.zeros((1, d_model), jnp.float32))

    layers = []
    for _ in range(n_layers):
        ln1_a, ln1_b = ln()
        ln2_a, ln2_b = ln()
        q, k, v = lin(d_model, d_model), lin(d_model, d_model), lin(d_model, d_model)
        layers.append({
            "ln1_a": ln1_a, "ln1_b": ln1_b,
            "ln2_a": ln2_a, "ln2_b": ln2_b,
            # fused QKV projection: one read of xn, one wide MXU pass
            "w_qkv": jnp.concatenate([q["w"], k["w"], v["w"]], axis=1),
            "b_qkv": jnp.concatenate([q["b"], k["b"], v["b"]], axis=1),
            "o": lin(d_model, d_model),
            "ff1": lin(d_model, d_ff), "ff2": lin(d_ff, d_model),
        })
    norm_a, norm_b = ln()
    return {
        "embed": lin(d_in, d_model),
        "layers": layers,
        "norm_a": norm_a, "norm_b": norm_b,
        "final": lin(d_model, vocab),
        "h": h, "d_model": d_model,
    }


# ------------------------------ Encoder forward ----------------------------- #

def encoder_forward(x, params, mask=None):
    # TODO(synk): attention mask path not wired (forward contract is mask=None).
    del mask
    B, S, _ = x.shape
    d_model = params["d_model"]
    h = params["h"]

    # x = self.embed(x)
    xt = embed(x.reshape(B * S, -1), params["embed"]["w"], params["embed"]["b"])

    # for layer in self.layers: x = layer(x, mask)
    for lp in params["layers"]:
        # sublayer 0: x + O(self_attn(LN1(x)))  -- QKV fused; attention, O-proj
        # and the residual add fused in one per-batch kernel (dense stores).
        qkv = ln_qkv(xt, lp["ln1_a"], lp["ln1_b"], lp["w_qkv"], lp["b_qkv"])
        xt = attention_block(qkv.reshape(B, S, -1),
                             xt.reshape(B, S, d_model),
                             lp["o"]["w"], lp["o"]["b"], h, d_model)
        xt = xt.reshape(B * S, d_model)

        # sublayer 1: x + FF2(relu(FF1(LN2(x))))  -- d_ff tiled, accumulated
        xt = ffn_residual(xt, lp["ln2_a"], lp["ln2_b"],
                          lp["ff1"]["w"], lp["ff1"]["b"],
                          lp["ff2"]["w"], lp["ff2"]["b"])

    # log_softmax(final_layer(norm(x)), dim=-1)  -- vocab-tiled, online LSE
    out = final_head(xt, params["norm_a"], params["norm_b"],
                     params["final"]["w"], params["final"]["b"])
    return out.reshape(B, S, -1)


# --------------------------------- main ------------------------------------- #

if __name__ == "__main__":
    B, S, D_IN = 2, 8, 16
    D_MODEL, H, D_FF, N_LAYERS, VOCAB = 32, 4, 64, 2, 16

    root = jax.random.PRNGKey(0)
    k_params, k_x = jax.random.split(root)
    params = init_params(k_params, D_IN, D_MODEL, H, D_FF, N_LAYERS, VOCAB)
    x = jax.random.normal(k_x, (B, S, D_IN), dtype=jnp.float32)

    out = encoder_forward(x, params, mask=None)
    out = jax.block_until_ready(out)

    assert out.shape == (B, S, VOCAB), out.shape
    # log_softmax sanity: probabilities along last axis sum to 1 (the LSE
    # normalization is exact f32 even though matmul operands are bf16).
    prob_sums = jnp.exp(out).sum(-1)
    assert bool(jnp.all(jnp.abs(prob_sums - 1.0) < 1e-3)), prob_sums

    print("KERNEL_OK")
</pallas_src>

<mosaic_0001>
module attributes {stable_mosaic.version = 11 : i64} {
  func.func @_k(%arg0: i32, %arg1: i32, %arg2: memref<8x128xf32, #tpu.memory_space<vmem>>, %arg3: memref<8x128xf32, #tpu.memory_space<vmem>>, %arg4: memref<8x128xf32, #tpu.memory_space<vmem>>) attributes {dimension_semantics = [#tpu.dimension_semantics<parallel>, #tpu.dimension_semantics<arbitrary>], iteration_bounds = array<i64: 2, 1>, scalar_prefetch = 0 : i64, scratch_operands = 0 : i64, tpu.core_type = #tpu.core_type<tc>, window_params = [{pipeline_mode = #tpu.pipeline_mode<synchronous>, transform_indices = @transform_0, window_bounds = array<i64: 8, 128>}, {transform_indices = @transform_1, window_bounds = array<i64: 8, 128>}, {transform_indices = @transform_2, window_bounds = array<i64: 8, 128>}]} {
    %c0 = arith.constant 0 : index
    %c0_0 = arith.constant 0 : index
    %0 = vector.load %arg3[%c0, %c0_0] : memref<8x128xf32, #tpu.memory_space<vmem>>, vector<8x128xf32>
    %c0_1 = arith.constant 0 : index
    %c0_2 = arith.constant 0 : index
    %1 = vector.load %arg2[%c0_1, %c0_2] : memref<8x128xf32, #tpu.memory_space<vmem>>, vector<8x128xf32>
    %2 = arith.addf %0, %1 : vector<8x128xf32>
    %c0_3 = arith.constant 0 : index
    %c0_4 = arith.constant 0 : index
    %3 = vector.load %arg4[%c0_3, %c0_4] : memref<8x128xf32, #tpu.memory_space<vmem>>, vector<8x128xf32>
    tpu.vector_store %arg4[%c0_3, %c0_4], %2 {strides = array<i32>} : memref<8x128xf32, #tpu.memory_space<vmem>>, vector<8x128xf32>,
    return
  }
  func.func @transform_0(%arg0: i32, %arg1: i32) -> (i32, i32) {
    %c0_i32 = arith.constant 0 : i32
    %c0_i32_0 = arith.constant 0 : i32
    %c0_i32_1 = arith.constant 0 : i32
    return %c0_i32, %c0_i32_0 : i32, i32
  }
  func.func @transform_1(%arg0: i32, %arg1: i32) -> (i32, i32) {
    %c0_i32 = arith.constant 0 : i32
    %c0_i32_0 = arith.constant 0 : i32
    return %arg0, %c0_i32 : i32, i32
  }
  func.func @transform_2(%arg0: i32, %arg1: i32) -> (i32, i32) {
    %c0_i32 = arith.constant 0 : i32
    %c0_i32_0 = arith.constant 0 : i32
    return %arg0, %c0_i32 : i32, i32
  }
}

module attributes {stable_mosaic.version = 11 : i64} {
  func.func @_embed_kernel(%arg0: i32, %arg1: memref<16x16xf32, #tpu.memory_space<vmem>>, %arg2: memref<16x32xbf16, #tpu.memory_space<vmem>>, %arg3: memref<1x32xf32, #tpu.memory_space<vmem>>, %arg4: memref<16x32xf32, #tpu.memory_space<vmem>>) attributes {dimension_semantics = [#tpu.dimension_semantics<parallel>], iteration_bounds = array<i64: 1>, scalar_prefetch = 0 : i64, scratch_operands = 0 : i64, tpu.core_type = #tpu.core_type<tc>, window_params = [{transform_indices = @transform_0, window_bounds = array<i64: 16, 16>}, {pipeline_mode = #tpu.pipeline_mode<synchronous>, transform_indices = @transform_1, window_bounds = array<i64: 16, 32>}, {pipeline_mode = #tpu.pipeline_mode<synchronous>, transform_indices = @transform_2, window_bounds = array<i64: 1, 32>}, {transform_indices = @transform_3, window_bounds = array<i64: 16, 32>}]} {
    %c0 = arith.constant 0 : index
    %c0_0 = arith.constant 0 : index
    %0 = vector.load %arg1[%c0, %c0_0] : memref<16x16xf32, #tpu.memory_space<vmem>>, vector<16x16xf32>
    %c0_1 = arith.constant 0 : index
    %c0_2 = arith.constant 0 : index
    %1 = vector.load %arg2[%c0_1, %c0_2] : memref<16x32xbf16, #tpu.memory_space<vmem>>, vector<16x32xbf16>
    %2 = arith.truncf %0 : vector<16x16xf32> to vector<16x16xbf16>
    %cst = arith.constant dense<0.000000e+00> : vector<16x32xf32>
    %3 = tpu.matmul %2, %1, %cst {dimension_numbers = #tpu.dot_dimension_numbers<[1], [0], [0], [1], [0, 0, 1, 1], [], []>} : vector<16x16xbf16>, vector<16x32xbf16>, vector<16x32xf32> -> vector<16x32xf32>
    %c0_3 = arith.constant 0 : index
    %c0_4 = arith.constant 0 : index
    %4 = vector.load %arg3[%c0_3, %c0_4] : memref<1x32xf32, #tpu.memory_space<vmem>>, vector<1x32xf32>
    %5 = vector.broadcast %4 : vector<1x32xf32> to vector<16x32xf32>
    %6 = arith.addf %3, %5 : vector<16x32xf32>
    %c0_5 = arith.constant 0 : index
    %c0_6 = arith.constant 0 : index
    %7 = vector.load %arg4[%c0_5, %c0_6] : memref<16x32xf32, #tpu.memory_space<vmem>>, vector<16x32xf32>
    tpu.vector_store %arg4[%c0_5, %c0_6], %6 {strides = array<i32>} : memref<16x32xf32, #tpu.memory_space<vmem>>, vector<16x32xf32>,
    return
  }
  func.func @transform_0(%arg0: i32) -> (i32, i32) {
    %c0_i32 = arith.constant 0 : i32
    %c0_i32_0 = arith.constant 0 : i32
    return %arg0, %c0_i32 : i32, i32
  }
  func.func @transform_1(%arg0: i32) -> (i32, i32) {
    %c0_i32 = arith.constant 0 : i32
    %c0_i32_0 = arith.constant 0 : i32
    %c0_i32_1 = arith.constant 0 : i32
    return %c0_i32, %c0_i32_0 : i32, i32
  }
  func.func @transform_2(%arg0: i32) -> (i32, i32) {
    %c0_i32 = arith.constant 0 : i32
    %c0_i32_0 = arith.constant 0 : i32
    %c0_i32_1 = arith.constant 0 : i32
    return %c0_i32, %c0_i32_0 : i32, i32
  }
  func.func @transform_3(%arg0: i32) -> (i32, i32) {
    %c0_i32 = arith.constant 0 : i32
    %c0_i32_0 = arith.constant 0 : i32
    return %arg0, %c0_i32 : i32, i32
  }
}

</mosaic_0001>

<llo_original>
// kernel: tpu_custom_call.1
$region0: #{tpu_custom_call.1}
  #allocation0 [shape = 'u32[]', space=smem, size = 0x4, offset = 0x4, fixed_abs, tag = 'smem constant byte address 0x4 - core index']
  #allocation1 [shape = 'u32[144,128]{1,0:T(1,128)}', space=vmem, size = 0x12000, scoped, tag = 'internal scratch']
  %s0 = inlined_call_operand.hbm [shape: f32[8,128], index: 0, kind: input, shape index: {}]
  %s1 = inlined_call_operand.hbm [shape: f32[16,128], index: 1, kind: input, shape index: {}]
  %s2 = inlined_call_operand.hbm [shape: f32[16,128], index: 2, kind: output, shape index: {}]
  %s3 = sld [smem:[#allocation0]]
  $region49: #{tpu_custom_call.1} parent=0
    _
  %s5 = ssub.s32 1, %s3
  %s6 = scalar_select 0, %s5, %s3
  $region1: #{tpu_custom_call.1} parent=0
    #allocation2 [shape = 'u8[4096]{0}', space=vmem, size = 0x1000, scoped, tag = 'input window, operand 0, single buffered']
    #allocation3 [shape = 's32[2]{0}', space=sflag, size = 0x8, scoped, tag = 'scoped memory for tpu_custom_call.1']
    #allocation4 [shape = 's32[2]{0}', space=sflag, size = 0x8, scoped, tag = 'scoped memory for tpu_custom_call.1']
    #allocation5 [shape = 'u8[8192]{0}', space=vmem, size = 0x2000, scoped, tag = 'input window, operand 1']
    #allocation6 [shape = 's32[2]{0}', space=sflag, size = 0x8, scoped, tag = 'scoped memory for tpu_custom_call.1']
    #allocation7 [shape = 'u8[8192]{0}', space=vmem, size = 0x2000, scoped, tag = 'output window, operand 0']
    %7 = vsyncpa [#allocation3], 0
    %8 = vsyncpa [#allocation6], 0
    %s9 = scalar_lea.sflag [#allocation6], 1
    %10 = vsyncpa %s9, 0
    %11 = vsyncpa [#allocation4], 0
    %s12 = scalar_lea.sflag [#allocation4], 1
    %13 = vsyncpa %s12, 0
    loop: start=0, step=1, limit=4
    $region2: #{tpu_custom_call.1} parent=1 // loop_pre_header
      _
    $region3: #{tpu_custom_call.1} parent=1 // loop_header
      %s15 = sphi 0, %s19
      %p16 = scmp.ge.s32.totalorder %s15, 4
      %s22 = sphi 0, %s34
      %s23 = sphi 0, %s30
      %s24 = sphi 0, %s22
      %s25 = sphi 0, %s23
      %s26 = sphi 0, %s24
      %s27 = sphi 0, %s25
      %s35 = sphi 0, %s35
      %s37 = sphi 0, %s35
      %s38 = sphi 0, %s37
      %s52 = sphi 0, %s38
      %s58 = sphi 0, %s60
      %s61 = sphi 0, %s58
      %s62 = sphi 0, %s61
      %s78 = sphi 0, %s62
      %s84 = sphi 0, %s86
      %s87 = sphi 0, %s84
      %s88 = sphi 0, %s87
      %s104 = sphi 0, %s88
    $region4: #{tpu_custom_call.1} parent=1 // loop_header_branch
      %18 = sbr.rel (%p16) target = $region8
    $region5: #{tpu_custom_call.1} parent=1 // loop_body
      %s20 = ssub.s32 %s15, 1
      %s21 = ssub.s32 %s15, 2
      %s28 = sadd.s32 1, %s23
      %p29 = scmp.ge.s32.totalorder %s28, 1
      %s30 = scalar_select %p29, 0, %s28
      %s31 = sadd.s32 1, %s22
      %s32 = scalar_select %p29, %s31, %s22
      %p33 = scmp.ge.s32.totalorder %s32, 2
      %s34 = scalar_select %p33, 0, %s32
      %s36 = sadd.s32 %s35, 1
      %p39 = scmp.eq.s32.totalorder %s15, 1
      %p40 = scmp.ne.s32.totalorder %s35, %s37
      %p41 = scmp.eq.s32.totalorder %s15, 0
      %p42 = por %p40, %p41
      %p43 = scmp.ne.s32.totalorder %s35, %s37
      %p44 = scmp.eq.s32.totalorder %s20, 1
      %p45 = por %p43, %p44
      %p46 = scmp.ne.s32.totalorder %s37, %s38
      %p47 = scmp.eq.s32.totalorder %s20, 0
      %p48 = por %p46, %p47
      %p49 = scmp.ne.s32.totalorder %s37, %s38
      %p50 = scmp.eq.s32.totalorder %s21, 1
      %p51 = por %p49, %p50
      %p53 = scmp.ne.s32.totalorder %s38, %s52
      %p54 = scmp.eq.s32.totalorder %s21, 0
      %p55 = por %p53, %p54
      %s56 = ssub.s32 %s22, %s34
      %p57 = scmp.eq.s32.totalorder %s56, 0
      %s59 = sadd.s32 %s58, 1
      %s60 = scalar_select %p57, %s58, %s59
      %p63 = pneg %p57
      %p64 = scmp.eq.s32.totalorder %s15, 1
      %p65 = por %p63, %p64
      %p66 = scmp.ne.s32.totalorder %s58, %s61
      %p67 = scmp.eq.s32.totalorder %s15, 0
      %p68 = por %p66, %p67
      %p69 = scmp.ne.s32.totalorder %s58, %s61
      %p70 = scmp.eq.s32.totalorder %s20, 1
      %p71 = por %p69, %p70
      %p72 = scmp.ne.s32.totalorder %s61, %s62
      %p73 = scmp.eq.s32.totalorder %s20, 0
      %p74 = por %p72, %p73
      %p75 = scmp.ne.s32.totalorder %s61, %s62
      %p76 = scmp.eq.s32.totalorder %s21, 1
      %p77 = por %p75, %p76
      %p79 = scmp.ne.s32.totalorder %s62, %s78
      %p80 = scmp.eq.s32.totalorder %s21, 0
      %p81 = por %p79, %p80
      %s82 = ssub.s32 %s22, %s34
      %p83 = scmp.eq.s32.totalorder %s82, 0
      %s85 = sadd.s32 %s84, 1
      %s86 = scalar_select %p83, %s84, %s85
      %p89 = pneg %p83
      %p90 = scmp.eq.s32.totalorder %s15, 1
      %p91 = por %p89, %p90
      %p92 = scmp.ne.s32.totalorder %s84, %s87
      %p93 = scmp.eq.s32.totalorder %s15, 0
      %p94 = por %p92, %p93
      %p95 = scmp.ne.s32.totalorder %s84, %s87
      %p96 = scmp.eq.s32.totalorder %s20, 1
      %p97 = por %p95, %p96
      %p98 = scmp.ne.s32.totalorder %s87, %s88
      %p99 = scmp.eq.s32.totalorder %s20, 0
      %p100 = por %p98, %p99
      %p101 = scmp.ne.s32.totalorder %s87, %s88
      %p102 = scmp.eq.s32.totalorder %s21, 1
      %p103 = por %p101, %p102
      %p105 = scmp.ne.s32.totalorder %s88, %s104
      %p106 = scmp.eq.s32.totalorder %s21, 0
      %p107 = por %p105, %p106
      %p108 = scmp.le.s32.totalorder 1, %s15
      %p109 = scmp.lt.s32.totalorder %s15, 3
      %p110 = pnand %p108, %p109
      %p111 = pneg %p110
      // Predicated region
      $region9: #{tpu_custom_call.1} parent=5 // pred_check
        _
      $region10: #{tpu_custom_call.1} parent=5 // pred_check_branch
        %113 = sbr.rel (%p110) target = $region12
      $region11: #{tpu_custom_call.1} parent=5 // pred_region
        %s114 = ssub.s32 %s15, 1
        // Predicated region
        $region13: #{tpu_custom_call.1} parent=11 // pred_check
          %p115 = pneg %p48
        $region14: #{tpu_custom_call.1} parent=11 // pred_check_branch
          %117 = sbr.rel (%p115) target = $region16
        $region15: #{tpu_custom_call.1} parent=11 // pred_region
          %s119 = ssub.s32 128, 128
          %120 = vsyncadd [#allocation3], %s119
          %s122 = sshll.u32 [#allocation2], 4
          %s123 = int_to_ptr.vmem [resolvable:$true] %s122
          %125 = dma.hbm_to_vmem [thread:$0]  %s0, 128, %s123, [#allocation3]
        $region16: #{tpu_custom_call.1} parent=11 // pred_fallthru
          _
      $region12: #{tpu_custom_call.1} parent=5 // pred_fallthru
        _
      %p126 = scmp.lt.s32.totalorder %s15, 2
      // Predicated region
      $region17: #{tpu_custom_call.1} parent=5 // pred_check
        %p127 = pneg %p126
      $region18: #{tpu_custom_call.1} parent=5 // pred_check_branch
        %129 = sbr.rel (%p127) target = $region20
      $region19: #{tpu_custom_call.1} parent=5 // pred_region
        // Predicated region
        $region21: #{tpu_custom_call.1} parent=19 // pred_check
          %p130 = pneg %p68
        $region22: #{tpu_custom_call.1} parent=19 // pred_check_branch
          %132 = sbr.rel (%p130) target = $region24
        $region23: #{tpu_custom_call.1} parent=19 // pred_region
          %s133 = sand.u32 %s58, 1
          %s134 = scalar_lea.sflag [#allocation6], %s133
          %s135 = sand.u32 %s58, 1
          %s136 = smul.addr %s135, 8
          %s137 = scalar_lea.vmem [#allocation5], %s136
          %s139 = ssub.s32 128, 128
          %140 = vsyncadd %s134, %s139
          %s141 = smul.addr %s22, 128
          %s142 = scalar_lea.hbm %s1, %s141
          %s144 = sshll.u32 %s137, 4
          %s145 = int_to_ptr.vmem [resolvable:$true] %s144
          %147 = dma.hbm_to_vmem [thread:$0]  %s142, 128, %s145, %s134
        $region24: #{tpu_custom_call.1} parent=19 // pred_fallthru
          _
      $region20: #{tpu_custom_call.1} parent=5 // pred_fallthru
        _
      %p148 = scmp.le.s32.totalorder 1, %s15
      %p149 = scmp.lt.s32.totalorder %s15, 3
      %p150 = pnand %p148, %p149
      %p151 = pneg %p150
      // Predicated region
      $region25: #{tpu_custom_call.1} parent=5 // pred_check
        _
      $region26: #{tpu_custom_call.1} parent=5 // pred_check_branch
        %153 = sbr.rel (%p150) target = $region28
      $region27: #{tpu_custom_call.1} parent=5 // pred_region
        %s154 = ssub.s32 %s15, 1
        // Predicated region
        $region29: #{tpu_custom_call.1} parent=27 // pred_check
          %p155 = pneg %p48
        $region30: #{tpu_custom_call.1} parent=27 // pred_check_branch
          %157 = sbr.rel (%p155) target = $region32
        $region31: #{tpu_custom_call.1} parent=27 // pred_region
          %158 = dma.done [#allocation3], 128
        $region32: #{tpu_custom_call.1} parent=27 // pred_fallthru
          _
        %s159 = sand.u32 %s61, 1
        %s160 = scalar_lea.sflag [#allocation6], %s159
        %s161 = sand.u32 %s61, 1
        %s162 = smul.addr %s161, 8
        %s163 = scalar_lea.vmem [#allocation5], %s162
        // Predicated region
        $region33: #{tpu_custom_call.1} parent=27 // pred_check
          %p164 = pneg %p74
        $region34: #{tpu_custom_call.1} parent=27 // pred_check_branch
          %166 = sbr.rel (%p164) target = $region36
        $region35: #{tpu_custom_call.1} parent=27 // pred_region
          %167 = dma.done %s160, 128
        $region36: #{tpu_custom_call.1} parent=27 // pred_fallthru
          _
        %p168 = pneg %p48
        %p169 = pneg %p45
        %s170 = sand.u32 %s61, 1
        %s171 = scalar_lea.sflag [#allocation6], %s170
        %s172 = sand.u32 %s61, 1
        %s173 = smul.addr %s172, 8
        %s174 = scalar_lea.vmem [#allocation5], %s173
        %p175 = pneg %p74
        %p176 = pneg %p71
        %p177 = pneg %p100
        %p178 = pneg %p97
        %s179 = sand.u32 %s87, 1
        %s180 = scalar_lea.sflag [#allocation4], %s179
        %s181 = sand.u32 %s87, 1
        %s182 = smul.addr %s181, 8
        %s183 = scalar_lea.vmem [#allocation7], %s182
        %v184 = vld [vmem:[%s163] sm:$0xff]
        %v185 = vld [vmem:[#allocation2] sm:$0xff]
        %v186 = vadd.f32 %v184, %v185
        %187 = vst [vmem:[%s183] sm:$0xff] %v186
        %s188 = sand.u32 %s87, 1
        %s189 = scalar_lea.sflag [#allocation4], %s188
        %s190 = sand.u32 %s87, 1
        %s191 = smul.addr %s190, 8
        %s192 = scalar_lea.vmem [#allocation7], %s191
        // Predicated region
        $region37: #{tpu_custom_call.1} parent=27 // pred_check
          %p193 = pneg %p97
        $region38: #{tpu_custom_call.1} parent=27 // pred_check_branch
          %195 = sbr.rel (%p193) target = $region40
        $region39: #{tpu_custom_call.1} parent=27 // pred_region
          %s197 = ssub.s32 128, 128
          %198 = vsyncadd %s189, %s197
          %s199 = smul.addr %s24, 128
          %s200 = scalar_lea.hbm %s2, %s199
          %s202 = sshll.u32 %s192, 4
          %s203 = int_to_ptr.vmem [resolvable:$true] %s202
          %205 = dma.vmem_to_hbm [thread:$0]  %s203, 128, %s200, %s189
        $region40: #{tpu_custom_call.1} parent=27 // pred_fallthru
          _
      $region28: #{tpu_custom_call.1} parent=5 // pred_fallthru
        _
      %p206 = scmp.le.s32.totalorder 2, %s15
      // Predicated region
      $region41: #{tpu_custom_call.1} parent=5 // pred_check
        %p207 = pneg %p206
      $region42: #{tpu_custom_call.1} parent=5 // pred_check_branch
        %209 = sbr.rel (%p207) target = $region44
      $region43: #{tpu_custom_call.1} parent=5 // pred_region
        %s210 = ssub.s32 %s15, 2
        // Predicated region
        $region45: #{tpu_custom_call.1} parent=43 // pred_check
          %p211 = pneg %p103
        $region46: #{tpu_custom_call.1} parent=43 // pred_check_branch
          %213 = sbr.rel (%p211) target = $region48
        $region47: #{tpu_custom_call.1} parent=43 // pred_region
          %s214 = sand.u32 %s88, 1
          %s215 = scalar_lea.sflag [#allocation4], %s214
          %s216 = sand.u32 %s88, 1
          %s217 = smul.addr %s216, 8
          %s218 = scalar_lea.vmem [#allocation7], %s217
          %219 = dma.done %s215, 128
        $region48: #{tpu_custom_call.1} parent=43 // pred_fallthru
          _
      $region44: #{tpu_custom_call.1} parent=5 // pred_fallthru
        _
    $region6: #{tpu_custom_call.1} parent=1 // loop_footer
      %s19 = sadd.s32 1, %s15
    $region7: #{tpu_custom_call.1} parent=1 // loop_footer_branch
      %14 = sbr.rel target = $region3
    $region8: #{tpu_custom_call.1} parent=1 // loop_exit
      _
    %220 = vsyncpa [#allocation3], 1
    %s221 = scalar_lea.sflag [#allocation3], 1
    %222 = vsyncpa %s221, 1
    %223 = vsyncpa [#allocation6], 1
    %s224 = scalar_lea.sflag [#allocation6], 1
    %225 = vsyncpa %s224, 1
    %226 = vsyncpa [#allocation4], 1
    %s227 = scalar_lea.sflag [#allocation4], 1
    %228 = vsyncpa %s227, 1

// kernel: tpu_custom_call.1
$region0: #{tpu_custom_call.1}
  #allocation0 [shape = 'u32[]', space=smem, size = 0x4, offset = 0x4, fixed_abs, tag = 'smem constant byte address 0x4 - core index']
  #allocation1 [shape = 'u32[144,128]{1,0:T(1,128)}', space=vmem, size = 0x12000, scoped, tag = 'internal scratch']
  %s0 = inlined_call_operand.hbm [shape: f32[16,16], index: 0, kind: input, shape index: {}]
  %s1 = inlined_call_operand.hbm [shape: bf16[16,32], index: 1, kind: input, shape index: {}]
  %s2 = inlined_call_operand.vmem [shape: f32[1,32], index: 2, kind: input, shape index: {}]
  %s3 = inlined_call_operand.hbm [shape: f32[16,32], index: 3, kind: output, shape index: {}]
  %s4 = sld [smem:[#allocation0]]
  $region30: #{tpu_custom_call.1} parent=0
    _
  %s6 = ssub.s32 1, %s4
  %s7 = scalar_select 0, %s6, %s4
  $region1: #{tpu_custom_call.1} parent=0
    #allocation2 [shape = 'u8[8192]{0}', space=vmem, size = 0x2000, scoped, tag = 'input window, operand 0, single buffered']
    #allocation3 [shape = 's32[1]{0}', space=sflag, size = 0x4, scoped, tag = 'scoped memory for tpu_custom_call.1']
    #allocation4 [shape = 's32[1]{0}', space=sflag, size = 0x4, scoped, tag = 'scoped memory for tpu_custom_call.1']
    #allocation5 [shape = 'u8[4096]{0}', space=vmem, size = 0x1000, scoped, tag = 'input window, operand 1, single buffered']
    #allocation6 [shape = 's32[1]{0}', space=sflag, size = 0x4, scoped, tag = 'scoped memory for tpu_custom_call.1']
    #allocation7 [shape = 'u8[8192]{0}', space=vmem, size = 0x2000, scoped, tag = 'output window, operand 0, single buffered']
    %8 = vsyncpa [#allocation3], 0
    %9 = vsyncpa [#allocation6], 0
    %10 = vsyncpa [#allocation4], 0
    // Predicated region
    $region2: #{tpu_custom_call.1} parent=1 // pred_check
      _
    $region3: #{tpu_custom_call.1} parent=1 // pred_check_branch
      %12 = sbr.rel (0) target = $region5
    $region4: #{tpu_custom_call.1} parent=1 // pred_region
      %s14 = ssub.s32 256, 256
      %15 = vsyncadd [#allocation3], %s14
      %s16 = sshll.u32 [#allocation2], 4
      %s17 = int_to_ptr.vmem [resolvable:$true] %s16
      %22 = dma.hbm_to_vmem [thread:$0]  %s0, 256, %s17, [#allocation3], 128, 128, 8
    $region5: #{tpu_custom_call.1} parent=1 // pred_fallthru
      _
    // Predicated region
    $region6: #{tpu_custom_call.1} parent=1 // pred_check
      _
    $region7: #{tpu_custom_call.1} parent=1 // pred_check_branch
      %24 = sbr.rel (0) target = $region9
    $region8: #{tpu_custom_call.1} parent=1 // pred_region
      %s26 = ssub.s32 128, 128
      %27 = vsyncadd [#allocation6], %s26
      %s28 = sshll.u32 [#allocation5], 4
      %s29 = int_to_ptr.vmem [resolvable:$true] %s28
      %34 = dma.hbm_to_vmem [thread:$0]  %s1, 128, %s29, [#allocation6], 64, 64, 4
    $region9: #{tpu_custom_call.1} parent=1 // pred_fallthru
      _
    // Predicated region
    $region10: #{tpu_custom_call.1} parent=1 // pred_check
      _
    $region11: #{tpu_custom_call.1} parent=1 // pred_check_branch
      %36 = sbr.rel (0) target = $region13
    $region12: #{tpu_custom_call.1} parent=1 // pred_region
      _
    $region13: #{tpu_custom_call.1} parent=1 // pred_fallthru
      _
    // Predicated region
    $region14: #{tpu_custom_call.1} parent=1 // pred_check
      _
    $region15: #{tpu_custom_call.1} parent=1 // pred_check_branch
      %38 = sbr.rel (0) target = $region17
    $region16: #{tpu_custom_call.1} parent=1 // pred_region
      %39 = dma.done [#allocation3], 256
    $region17: #{tpu_custom_call.1} parent=1 // pred_fallthru
      _
    // Predicated region
    $region18: #{tpu_custom_call.1} parent=1 // pred_check
      _
    $region19: #{tpu_custom_call.1} parent=1 // pred_check_branch
      %41 = sbr.rel (0) target = $region21
    $region20: #{tpu_custom_call.1} parent=1 // pred_region
      %42 = dma.done [#allocation6], 128
    $region21: #{tpu_custom_call.1} parent=1 // pred_fallthru
      _
    %v44 = vld [vmem:[#allocation2] sm:$0xff]
    %v45 = vld [vmem:[#allocation2 + $0x8] sm:$0xff]
    %v46 = vld [vmem:[#allocation5] sm:$0xf]
    %v47 = vld [vmem:[#allocation5 + $0x4] sm:$0xf]
    %v48 = vpack.c.bf16 %v45, %v44
    %v49 = vld [vmem:[%s2] sm:$0x1]
    %v51 = vlaneseq
    %v52 = vshrl.u32 %v51, 7
    %v53 = vsub.s32 0, %v52
    %v54 = vrot.slane %v49, %v53
    %v58 = vunpack.c.l.b16 %v46
    %v59 = vunpack.c.l.b16 %v47
    %v60 = vpack.c.b16 %v59, %v58
    %vm62 = vcmask 130048
    %v64 = vsel %vm62, %v48, 0
    %66 = vmatprep.subr.bf16.mxu0 0
    %67 = vmatpush1.bf16.msra.mxu0 %v60
    %68 = vmatprep.subr.bf16.mxu0 0
    %69 = vmatpush1.bf16.msra.mxu0 0
    %70 = vmatprep.subr.bf16.mxu0 0
    %71 = vmatpush1.bf16.msra.mxu0 0
    %72 = vmatprep.subr.bf16.mxu0 0
    %73 = vmatpush1.bf16.msra.mxu0 0
    %74 = vmatprep.subr.bf16.mxu0 0
    %75 = vmatpush1.bf16.msra.mxu0 0
    %76 = vmatprep.subr.bf16.mxu0 0
    %77 = vmatpush1.bf16.msra.mxu0 0
    %78 = vmatprep.subr.bf16.mxu0 0
    %79 = vmatpush1.bf16.msra.mxu0 0
    %80 = vmatprep.subr.bf16.mxu0 0
    %81 = vmatpush1.bf16.msra.mxu0 0
    %82 = vmatprep.subr.bf16.mxu0 0
    %83 = vmatpush1.bf16.msra.mxu0 0
    %84 = vmatprep.subr.bf16.mxu0 0
    %85 = vmatpush1.bf16.msra.mxu0 0
    %86 = vmatprep.subr.bf16.mxu0 0
    %87 = vmatpush1.bf16.msra.mxu0 0
    %88 = vmatprep.subr.bf16.mxu0 0
    %89 = vmatpush1.bf16.msra.mxu0 0
    %90 = vmatprep.subr.bf16.mxu0 0
    %91 = vmatpush1.bf16.msra.mxu0 0
    %92 = vmatprep.subr.bf16.mxu0 0
    %93 = vmatpush1.bf16.msra.mxu0 0
    %94 = vmatprep.subr.bf16.mxu0 0
    %95 = vmatpush1.bf16.msra.mxu0 0
    %96 = vmatprep.subr.bf16.mxu0 0
    %97 = vmatpush1.bf16.msra.mxu0 0
    %98 = vmatprep.mubr.bf16.mxu0 0
    %99 = vmatmul.mubr.bf16.gmra.mrb[0].mxu0 %v64
    %v100 = vpop.f32.mrb[0].mxu0
    %v101 = vadd.f32 %v54, %v100
    %v102 = vpop.f32.mrb[0].mxu0
    %v103 = vpop.f32.mrb[0].mxu0
    %v104 = vadd.f32 %v54, %v103
    %v105 = vpop.f32.mrb[0].mxu0
    %106 = vdwg.mxu0
    %vm107 = vcmask 261120
    %108 = vst.msk [vmem:[#allocation7] sm:$0xff] %vm107, %v101
    %109 = vst.msk [vmem:[#allocation7 + $0x8] sm:$0xff] %vm107, %v104
    // Predicated region
    $region22: #{tpu_custom_call.1} parent=1 // pred_check
      _
    $region23: #{tpu_custom_call.1} parent=1 // pred_check_branch
      %111 = sbr.rel (0) target = $region25
    $region24: #{tpu_custom_call.1} parent=1 // pred_region
      %s113 = ssub.s32 256, 256
      %114 = vsyncadd [#allocation4], %s113
      %s115 = sshll.u32 [#allocation7], 4
      %s116 = int_to_ptr.vmem [resolvable:$true] %s115
      %121 = dma.vmem_to_hbm [thread:$0]  %s116, 256, %s3, [#allocation4], 128, 128, 8
    $region25: #{tpu_custom_call.1} parent=1 // pred_fallthru
      _
    // Predicated region
    $region26: #{tpu_custom_call.1} parent=1 // pred_check
      _
    $region27: #{tpu_custom_call.1} parent=1 // pred_check_branch
      %123 = sbr.rel (0) target = $region29
    $region28: #{tpu_custom_call.1} parent=1 // pred_region
      %124 = dma.done [#allocation4], 256
    $region29: #{tpu_custom_call.1} parent=1 // pred_fallthru
      _
    %125 = vsyncpa [#allocation3], 1
    %126 = vsyncpa [#allocation6], 1
    %127 = vsyncpa [#allocation4], 1

</llo_original>
